<compile_context>
chip_gen: v7x
topology: tpu7x:2x2x1
jax: 0.10.0
libtpu: 0.0.40
codegen_flags: <defaults>
</compile_context>

<pallas_src>
import jax
import jax.numpy as jnp
from jax.experimental import pallas as pl
from jax.experimental.pallas import tpu as pltpu


def _round_up(x, m):
    return (x + m - 1) // m * m


def ce_loss(stu_pred, label, *, tile_n=None, vmem_limit_bytes=48 * 1024 * 1024):
    """Pallas equivalent of F.cross_entropy(stu_pred, label) (mean reduction)."""
    n, c = stu_pred.shape
    itemsize = jnp.dtype(stu_pred.dtype).itemsize
    # Dtype-native sublane multiple: 8 (f32/i32), 16 (bf16/f16), 32 (int8/fp8).
    sub = max(8, 32 // max(itemsize, 1))

    if tile_n is None:
        # ~4 MiB native-dtype logits block: large enough to amortize per-step
        # overhead on v5e/v6e/v7x, small enough that 2x double-buffered input
        # plus ~2-3 (T,C) f32 temporaries stays well under 48 MiB on v7x.
        budget = 4 * 1024 * 1024
        rows = max(budget // max(c * itemsize, 1), sub)
        tile_n = min((rows // sub) * sub, 4096)
        tile_n = max(sub, min(tile_n, _round_up(n, sub)))
        # v7x megacore: prefer >= 2 (even) tiles so the "parallel" batch axis
        # splits across both TensorCores (no-op on single-TC v5e/v6e).
        if n > sub:
            want = max(2, pl.cdiv(n, tile_n))
            want += want % 2
            cand = max(sub, _round_up(pl.cdiv(n, want), sub))
            if pl.cdiv(n, cand) >= 2:
                tile_n = min(tile_n, cand)

    tile_n = int(max(sub, min(_round_up(int(tile_n), sub), _round_up(n, sub))))
    num_tiles = int(pl.cdiv(n, tile_n))
    ragged = (n % tile_n) != 0

    # Labels as a tiny (n, 1) int32 column; no padding needed — the ragged tail
    # of the last block is masked by row index inside the kernel.
    labels_2d = label.astype(jnp.int32).reshape(n, 1)

    def _ce_partial_kernel(logits_ref, labels_ref, out_ref):
        # logits_ref: (tile_n, c) NATIVE-dtype VMEM tile (f32 math done below)
        # labels_ref: (tile_n, 1) int32 VMEM tile
        # out_ref   : (1, 8, 128) f32 lane-dense tile <- this tile's partial sum
        x = logits_ref[...]                                           # (T, C)
        labels = labels_ref[...]                                      # (T, 1)

        # Per-row max and target-logit select on the native dtype (select keeps
        # exactly one element per row, so no precision loss); v5e widens bf16
        # VPU ops to f32 automatically.
        m = jnp.max(x, axis=-1, keepdims=True).astype(jnp.float32)    # (T, 1)
        class_ids = jax.lax.broadcasted_iota(jnp.int32, x.shape, 1)   # (T, C)
        tgt = jnp.sum(jnp.where(class_ids == labels, x, 0),
                      axis=-1, keepdims=True).astype(jnp.float32)     # (T, 1)

        # Fused upcast -> subtract -> exp -> row-sum (single (T,C) f32 pass).
        sumexp = jnp.sum(jnp.exp(x.astype(jnp.float32) - m),
                         axis=-1, keepdims=True)                      # (T, 1)

        # Per-row NLL = logsumexp(x) - x[label] = log(sumexp) + m - tgt.
        nll = jnp.log(sumexp) + m - tgt                               # (T, 1)

        if ragged:
            # Mask the ragged tail of the last block by global row index
            # (n, tile_n are static Python ints).
            row = (pl.program_id(0) * tile_n
                   + jax.lax.broadcasted_iota(jnp.int32, (tile_n, 1), 0))
            nll = jnp.where(row < n, nll, 0.0)

        # Lane-dense unmasked (8, 128) store; the wrapper reads element [0, 0].
        out_ref[...] = jnp.full(out_ref.shape, jnp.sum(nll), dtype=jnp.float32)

    partials = pl.pallas_call(
        _ce_partial_kernel,
        out_shape=jax.ShapeDtypeStruct((num_tiles, 8, 128), jnp.float32),
        grid=(num_tiles,),
        in_specs=[
            pl.BlockSpec((tile_n, c), lambda i: (i, 0)),
            pl.BlockSpec((tile_n, 1), lambda i: (i, 0)),
        ],
        out_specs=pl.BlockSpec((1, 8, 128), lambda i: (i, 0, 0)),
        compiler_params=pltpu.CompilerParams(
            dimension_semantics=("parallel",),
            vmem_limit_bytes=vmem_limit_bytes,
        ),
    )(stu_pred, labels_2d)

    # Mean over the original batch (F.cross_entropy default reduction='mean').
    return jnp.sum(partials[:, 0, 0]) / jnp.float32(n)


def ce_loss_ref(stu_pred, label):
    """Pure-JAX reference for correctness checking."""
    logp = jax.nn.log_softmax(stu_pred.astype(jnp.float32), axis=-1)
    nll = -jnp.take_along_axis(logp, label[:, None].astype(jnp.int32), axis=-1)
    return jnp.mean(nll)


if __name__ == "__main__":
    key = jax.random.PRNGKey(0)
    k1, k2, k3, k4 = jax.random.split(key, 4)

    # Small shapes; N deliberately NOT a multiple of the tile size so the
    # ragged-tail masking path is exercised.
    N, C = 50, 384
    stu_pred = jax.random.normal(k1, (N, C), dtype=jnp.float32)
    label = jax.random.randint(k2, (N,), 0, C, dtype=jnp.int32)
    ref = ce_loss_ref(stu_pred, label)

    # Explicit multi-tile path (grid iteration + ragged tail).
    loss_tiled = ce_loss(stu_pred, label, tile_n=16)
    jax.block_until_ready(loss_tiled)
    assert jnp.allclose(loss_tiled, ref, atol=1e-5, rtol=1e-5), (loss_tiled, ref)

    # Auto tile-size path (byte-budgeted tiles + >=2-tile megacore clamp).
    loss_auto = ce_loss(stu_pred, label)
    jax.block_until_ready(loss_auto)
    assert jnp.allclose(loss_auto, ref, atol=1e-5, rtol=1e-5), (loss_auto, ref)

    # Exactly-dividing batch (no ragged tail) sanity check.
    N2 = 64
    stu_pred2 = jax.random.normal(k3, (N2, C), dtype=jnp.float32)
    label2 = jax.random.randint(k4, (N2,), 0, C, dtype=jnp.int32)
    loss2 = ce_loss(stu_pred2, label2, tile_n=32)
    jax.block_until_ready(loss2)
    assert jnp.allclose(loss2, ce_loss_ref(stu_pred2, label2),
                        atol=1e-5, rtol=1e-5)

    print("KERNEL_OK")
</pallas_src>

<mosaic_0001>
module attributes {stable_mosaic.version = 11 : i64} {
  func.func @_ce_partial_kernel(%arg0: i32, %arg1: memref<16x384xf32, #tpu.memory_space<vmem>>, %arg2: memref<16x1xi32, #tpu.memory_space<vmem>>, %arg3: memref<1x8x128xf32, #tpu.memory_space<vmem>>) attributes {dimension_semantics = [#tpu.dimension_semantics<parallel>], iteration_bounds = array<i64: 4>, scalar_prefetch = 0 : i64, scratch_operands = 0 : i64, tpu.core_type = #tpu.core_type<tc>, window_params = [{transform_indices = @transform_0, window_bounds = array<i64: 16, 384>}, {transform_indices = @transform_1, window_bounds = array<i64: 16, 1>}, {transform_indices = @transform_2, window_bounds = array<i64: 1, 8, 128>}]} {
    %c0 = arith.constant 0 : index
    %c0_0 = arith.constant 0 : index
    %0 = vector.load %arg1[%c0, %c0_0] : memref<16x384xf32, #tpu.memory_space<vmem>>, vector<16x384xf32>
    %c0_1 = arith.constant 0 : index
    %c0_2 = arith.constant 0 : index
    %1 = vector.load %arg2[%c0_1, %c0_2] : memref<16x1xi32, #tpu.memory_space<vmem>>, vector<16x1xi32>
    %cst = arith.constant dense<0xFF800000> : vector<16xf32>
    %2 = vector.multi_reduction <maximumf>, %0, %cst [1] : vector<16x384xf32> to vector<16xf32>
    %3 = vector.shape_cast %2 : vector<16xf32> to vector<16x1xf32>
    %4 = tpu.iota {dimensions = array<i32: 1>} : vector<16x384xi32>
    %5 = vector.broadcast %1 : vector<16x1xi32> to vector<16x384xi32>
    %6 = arith.cmpi eq, %4, %5 : vector<16x384xi32>
    %c0_i32 = arith.constant 0 : i32
    %7 = arith.sitofp %c0_i32 : i32 to f32
    %8 = vector.broadcast %7 : f32 to vector<16x384xf32>
    %9 = arith.select %6, %0, %8 : vector<16x384xi1>, vector<16x384xf32>
    %cst_3 = arith.constant dense<0.000000e+00> : vector<16xf32>
    %10 = vector.multi_reduction <add>, %9, %cst_3 [1] : vector<16x384xf32> to vector<16xf32>
    %11 = vector.shape_cast %10 : vector<16xf32> to vector<16x1xf32>
    %12 = vector.broadcast %3 : vector<16x1xf32> to vector<16x384xf32>
    %13 = arith.subf %0, %12 : vector<16x384xf32>
    %14 = math.exp %13 : vector<16x384xf32>
    %cst_4 = arith.constant dense<0.000000e+00> : vector<16xf32>
    %15 = vector.multi_reduction <add>, %14, %cst_4 [1] : vector<16x384xf32> to vector<16xf32>
    %16 = vector.shape_cast %15 : vector<16xf32> to vector<16x1xf32>
    %17 = math.log %16 : vector<16x1xf32>
    %18 = arith.addf %17, %3 : vector<16x1xf32>
    %19 = arith.subf %18, %11 : vector<16x1xf32>
    %c16_i32 = arith.constant 16 : i32
    %20 = arith.muli %arg0, %c16_i32 : i32
    %21 = tpu.iota {dimensions = array<i32: 0>} : vector<16x1xi32>
    %22 = vector.broadcast %20 : i32 to vector<16x1xi32>
    %23 = arith.addi %22, %21 : vector<16x1xi32>
    %c50_i32 = arith.constant 50 : i32
    %24 = vector.broadcast %c50_i32 : i32 to vector<16x1xi32>
    %25 = arith.cmpi slt, %23, %24 : vector<16x1xi32>
    %cst_5 = arith.constant 0.000000e+00 : f32
    %26 = vector.broadcast %cst_5 : f32 to vector<16x1xf32>
    %27 = arith.select %25, %19, %26 : vector<16x1xi1>, vector<16x1xf32>
    %28 = vector.shape_cast %27 : vector<16x1xf32> to vector<1x16x1xf32>
    %cst_6 = arith.constant dense<0.000000e+00> : vector<1xf32>
    %29 = vector.multi_reduction <add>, %28, %cst_6 [1, 2] : vector<1x16x1xf32> to vector<1xf32>
    %30 = vector.shape_cast %29 : vector<1xf32> to vector<1x1x1xf32>
    %31 = vector.extract %30[0, 0, 0] : f32 from vector<1x1x1xf32>
    %32 = vector.broadcast %31 : f32 to vector<1x8x128xf32>
    %c0_7 = arith.constant 0 : index
    %c0_8 = arith.constant 0 : index
    %c0_9 = arith.constant 0 : index
    %33 = vector.load %arg3[%c0_7, %c0_8, %c0_9] : memref<1x8x128xf32, #tpu.memory_space<vmem>>, vector<1x8x128xf32>
    tpu.vector_store %arg3[%c0_7, %c0_8, %c0_9], %32 {strides = array<i32>} : memref<1x8x128xf32, #tpu.memory_space<vmem>>, vector<1x8x128xf32>,
    return
  }
  func.func @transform_0(%arg0: i32) -> (i32, i32) {
    %c0_i32 = arith.constant 0 : i32
    %c0_i32_0 = arith.constant 0 : i32
    return %arg0, %c0_i32 : i32, i32
  }
  func.func @transform_1(%arg0: i32) -> (i32, i32) {
    %c0_i32 = arith.constant 0 : i32
    %c0_i32_0 = arith.constant 0 : i32
    return %arg0, %c0_i32 : i32, i32
  }
  func.func @transform_2(%arg0: i32) -> (i32, i32, i32) {
    %c0_i32 = arith.constant 0 : i32
    %c0_i32_0 = arith.constant 0 : i32
    %c0_i32_1 = arith.constant 0 : i32
    return %arg0, %c0_i32, %c0_i32_0 : i32, i32, i32
  }
}

</mosaic_0001>

<llo_original>
// kernel: tpu_custom_call.1
$region0: #{tpu_custom_call.1}
  #allocation0 [shape = 'u32[]', space=smem, size = 0x4, offset = 0x4, fixed_abs, tag = 'smem constant byte address 0x4 - core index']
  #allocation1 [shape = 'u32[144,128]{1,0:T(1,128)}', space=vmem, size = 0x12000, scoped, tag = 'internal scratch']
  %s0 = inlined_call_operand.hbm [shape: f32[50,384], index: 0, kind: input, shape index: {}]
  %s1 = inlined_call_operand.vmem [shape: s32[50,1], index: 1, kind: input, shape index: {}]
  %s2 = inlined_call_operand.hbm [shape: f32[4,8,128], index: 2, kind: output, shape index: {}]
  %s3 = sld [smem:[#allocation0]]
  $region45: #{tpu_custom_call.1} parent=0
    _
  %s5 = ssub.s32 1, %s3
  %s6 = scalar_select 0, %s5, %s3
  $region1: #{tpu_custom_call.1} parent=0
    #allocation2 [shape = 'u8[49152]{0}', space=vmem, size = 0xc000, scoped, tag = 'input window, operand 0']
    #allocation3 [shape = 's32[2]{0}', space=sflag, size = 0x8, scoped, tag = 'scoped memory for tpu_custom_call.1']
    #allocation4 [shape = 's32[2]{0}', space=sflag, size = 0x8, scoped, tag = 'scoped memory for tpu_custom_call.1']
    #allocation5 [shape = 'u8[8192]{0}', space=vmem, size = 0x2000, scoped, tag = 'output window, operand 0']
    %7 = vsyncpa [#allocation3], 0
    %s8 = scalar_lea.sflag [#allocation3], 1
    %9 = vsyncpa %s8, 0
    %10 = vsyncpa [#allocation4], 0
    %s11 = scalar_lea.sflag [#allocation4], 1
    %12 = vsyncpa %s11, 0
    loop: start=0, step=1, limit=6
    $region2: #{tpu_custom_call.1} parent=1 // loop_pre_header
      _
    $region3: #{tpu_custom_call.1} parent=1 // loop_header
      %s14 = sphi 0, %s18
      %p15 = scmp.ge.s32.totalorder %s14, 6
      %s24 = sphi 0, %s26
      %s27 = sphi 0, %s24
      %s28 = sphi 0, %s27
      %s44 = sphi 0, %s28
      %s50 = sphi 0, %s52
      %s53 = sphi 0, %s50
      %s54 = sphi 0, %s53
      %s70 = sphi 0, %s54
      %s76 = sphi 0, %s78
      %s79 = sphi 0, %s76
      %s80 = sphi 0, %s79
      %s96 = sphi 0, %s80
    $region4: #{tpu_custom_call.1} parent=1 // loop_header_branch
      %17 = sbr.rel (%p15) target = $region8
    $region5: #{tpu_custom_call.1} parent=1 // loop_body
      %s19 = ssub.s32 %s14, 1
      %s20 = ssub.s32 %s14, 2
      %s21 = sadd.s32 %s14, 1
      %s22 = ssub.s32 %s14, %s21
      %p23 = scmp.eq.s32.totalorder %s22, 0
      %s25 = sadd.s32 %s24, 1
      %s26 = scalar_select %p23, %s24, %s25
      %p29 = pneg %p23
      %p30 = scmp.eq.s32.totalorder %s14, 3
      %p31 = por %p29, %p30
      %p32 = scmp.ne.s32.totalorder %s24, %s27
      %p33 = scmp.eq.s32.totalorder %s14, 0
      %p34 = por %p32, %p33
      %p35 = scmp.ne.s32.totalorder %s24, %s27
      %p36 = scmp.eq.s32.totalorder %s19, 3
      %p37 = por %p35, %p36
      %p38 = scmp.ne.s32.totalorder %s27, %s28
      %p39 = scmp.eq.s32.totalorder %s19, 0
      %p40 = por %p38, %p39
      %p41 = scmp.ne.s32.totalorder %s27, %s28
      %p42 = scmp.eq.s32.totalorder %s20, 3
      %p43 = por %p41, %p42
      %p45 = scmp.ne.s32.totalorder %s28, %s44
      %p46 = scmp.eq.s32.totalorder %s20, 0
      %p47 = por %p45, %p46
      %s48 = ssub.s32 %s14, %s21
      %p49 = scmp.eq.s32.totalorder %s48, 0
      %s51 = sadd.s32 %s50, 1
      %s52 = scalar_select %p49, %s50, %s51
      %p55 = pneg %p49
      %p56 = scmp.eq.s32.totalorder %s14, 3
      %p57 = por %p55, %p56
      %p58 = scmp.ne.s32.totalorder %s50, %s53
      %p59 = scmp.eq.s32.totalorder %s14, 0
      %p60 = por %p58, %p59
      %p61 = scmp.ne.s32.totalorder %s50, %s53
      %p62 = scmp.eq.s32.totalorder %s19, 3
      %p63 = por %p61, %p62
      %p64 = scmp.ne.s32.totalorder %s53, %s54
      %p65 = scmp.eq.s32.totalorder %s19, 0
      %p66 = por %p64, %p65
      %p67 = scmp.ne.s32.totalorder %s53, %s54
      %p68 = scmp.eq.s32.totalorder %s20, 3
      %p69 = por %p67, %p68
      %p71 = scmp.ne.s32.totalorder %s54, %s70
      %p72 = scmp.eq.s32.totalorder %s20, 0
      %p73 = por %p71, %p72
      %s74 = ssub.s32 %s14, %s21
      %p75 = scmp.eq.s32.totalorder %s74, 0
      %s77 = sadd.s32 %s76, 1
      %s78 = scalar_select %p75, %s76, %s77
      %p81 = pneg %p75
      %p82 = scmp.eq.s32.totalorder %s14, 3
      %p83 = por %p81, %p82
      %p84 = scmp.ne.s32.totalorder %s76, %s79
      %p85 = scmp.eq.s32.totalorder %s14, 0
      %p86 = por %p84, %p85
      %p87 = scmp.ne.s32.totalorder %s76, %s79
      %p88 = scmp.eq.s32.totalorder %s19, 3
      %p89 = por %p87, %p88
      %p90 = scmp.ne.s32.totalorder %s79, %s80
      %p91 = scmp.eq.s32.totalorder %s19, 0
      %p92 = por %p90, %p91
      %p93 = scmp.ne.s32.totalorder %s79, %s80
      %p94 = scmp.eq.s32.totalorder %s20, 3
      %p95 = por %p93, %p94
      %p97 = scmp.ne.s32.totalorder %s80, %s96
      %p98 = scmp.eq.s32.totalorder %s20, 0
      %p99 = por %p97, %p98
      %p100 = scmp.le.s32.totalorder 1, %s14
      %p101 = scmp.lt.s32.totalorder %s14, 5
      %p102 = pnand %p100, %p101
      %p103 = pneg %p102
      // Predicated region
      $region9: #{tpu_custom_call.1} parent=5 // pred_check
        _
      $region10: #{tpu_custom_call.1} parent=5 // pred_check_branch
        %105 = sbr.rel (%p102) target = $region12
      $region11: #{tpu_custom_call.1} parent=5 // pred_region
        %s106 = ssub.s32 %s14, 1
      $region12: #{tpu_custom_call.1} parent=5 // pred_fallthru
        _
      %p107 = scmp.lt.s32.totalorder %s14, 4
      // Predicated region
      $region13: #{tpu_custom_call.1} parent=5 // pred_check
        %p108 = pneg %p107
      $region14: #{tpu_custom_call.1} parent=5 // pred_check_branch
        %110 = sbr.rel (%p108) target = $region16
      $region15: #{tpu_custom_call.1} parent=5 // pred_region
        // Predicated region
        $region17: #{tpu_custom_call.1} parent=15 // pred_check
          %p111 = pneg %p34
        $region18: #{tpu_custom_call.1} parent=15 // pred_check_branch
          %113 = sbr.rel (%p111) target = $region20
        $region19: #{tpu_custom_call.1} parent=15 // pred_region
          %s114 = sand.u32 %s24, 1
          %s115 = scalar_lea.sflag [#allocation3], %s114
          %s116 = sand.u32 %s24, 1
          %s117 = smul.addr %s116, 48
          %s118 = scalar_lea.vmem [#allocation2], %s117
          %s119 = smul.u32 2, %s14
          %s120 = ssub.s32 7, %s119
          %p121 = scmp.lt.s32.totalorder %s120, 2
          %s122 = scalar_select %p121, %s120, 2
          %s123 = smul.u32 128, %s122
          %s124 = smul.u32 %s123, 3
          %s126 = ssub.s32 768, %s124
          %127 = vsyncadd %s115, %s126
          %p128 = scmp.ne.s32.totalorder 0, %s124
          %s129 = smul.addr %s119, 3
          %s130 = smul.addr %s129, 128
          %s131 = scalar_lea.hbm %s0, %s130
          %s132 = smul.u32 24, %s122
          %s133 = sshll.u32 %s118, 4
          %s134 = int_to_ptr.vmem [resolvable:$true] %s133
          %s135 = sshll.u32 %s132, 4
          %139 = dma.hbm_to_vmem [thread:$0]  (%p128), %s131, %s135, %s134, %s115, 384, 384, 24
        $region20: #{tpu_custom_call.1} parent=15 // pred_fallthru
          _
        // Predicated region
        $region21: #{tpu_custom_call.1} parent=15 // pred_check
          %p140 = pneg %p60
        $region22: #{tpu_custom_call.1} parent=15 // pred_check_branch
          %142 = sbr.rel (%p140) target = $region24
        $region23: #{tpu_custom_call.1} parent=15 // pred_region
          %s143 = smul.u32 2, %s14
          %s144 = ssub.s32 7, %s143
          %p145 = scmp.lt.s32.totalorder %s144, 2
          %s146 = scalar_select %p145, %s144, 2
          %s147 = smul.u32 128, %s146
          %p148 = scmp.lt.s32.totalorder %s143, 6
          %s149 = scalar_select %p148, %s143, 6
          %s150 = smul.addr %s149, 8
          %s151 = scalar_lea.vmem %s1, %s150
          %s152 = smul.u32 2, %s14
          %s153 = ssub.s32 7, %s152
          %p154 = scmp.lt.s32.totalorder %s153, 2
          %s155 = scalar_select %p154, %s153, 2
          %s156 = smul.u32 128, %s155
        $region24: #{tpu_custom_call.1} parent=15 // pred_fallthru
          _
      $region16: #{tpu_custom_call.1} parent=5 // pred_fallthru
        _
      %p157 = scmp.le.s32.totalorder 1, %s14
      %p158 = scmp.lt.s32.totalorder %s14, 5
      %p159 = pnand %p157, %p158
      %p160 = pneg %p159
      // Predicated region
      $region25: #{tpu_custom_call.1} parent=5 // pred_check
        _
      $region26: #{tpu_custom_call.1} parent=5 // pred_check_branch
        %162 = sbr.rel (%p159) target = $region28
      $region27: #{tpu_custom_call.1} parent=5 // pred_region
        %s163 = ssub.s32 %s14, 1
        %s164 = sand.u32 %s27, 1
        %s165 = scalar_lea.sflag [#allocation3], %s164
        %s166 = sand.u32 %s27, 1
        %s167 = smul.addr %s166, 48
        %s168 = scalar_lea.vmem [#allocation2], %s167
        // Predicated region
        $region29: #{tpu_custom_call.1} parent=27 // pred_check
          %p169 = pneg %p40
        $region30: #{tpu_custom_call.1} parent=27 // pred_check_branch
          %171 = sbr.rel (%p169) target = $region32
        $region31: #{tpu_custom_call.1} parent=27 // pred_region
          %172 = dma.done %s165, 768
        $region32: #{tpu_custom_call.1} parent=27 // pred_fallthru
          _
        %s173 = sand.u32 %s27, 1
        %s174 = scalar_lea.sflag [#allocation3], %s173
        %s175 = sand.u32 %s27, 1
        %s176 = smul.addr %s175, 48
        %s177 = scalar_lea.vmem [#allocation2], %s176
        %p178 = pneg %p40
        %p179 = pneg %p37
        %s180 = smul.u32 2, %s19
        %s181 = ssub.s32 7, %s180
        %p182 = scmp.lt.s32.totalorder %s181, 2
        %s183 = scalar_select %p182, %s181, 2
        %s184 = smul.u32 128, %s183
        %p185 = scmp.lt.s32.totalorder %s180, 6
        %s186 = scalar_select %p185, %s180, 6
        %s187 = smul.addr %s186, 8
        %s188 = scalar_lea.vmem %s1, %s187
        %p189 = pneg %p66
        %p190 = pneg %p63
        %p191 = pneg %p92
        %p192 = pneg %p89
        %s193 = sand.u32 %s79, 1
        %s194 = scalar_lea.sflag [#allocation4], %s193
        %s195 = sand.u32 %s79, 1
        %s196 = smul.addr %s195, 8
        %s197 = scalar_lea.vmem [#allocation5], %s196
        %s198 = smul.u32 2, %s19
        %s199 = ssub.s32 7, %s198
        %p200 = scmp.lt.s32.totalorder %s199, 2
        %s201 = scalar_select %p200, %s199, 2
        %s202 = smul.u32 128, %s201
        %s203 = smul.u32 %s202, 3
        %s204 = smul.u32 2, %s19
        %s205 = ssub.s32 7, %s204
        %p206 = scmp.lt.s32.totalorder %s205, 2
        %s207 = scalar_select %p206, %s205, 2
        %s208 = smul.u32 128, %s207
        %p209 = scmp.lt.s32.totalorder %s204, 6
        %s210 = scalar_select %p209, %s204, 6
        %s211 = smul.addr %s210, 8
        %s212 = scalar_lea.vmem %s1, %s211
        %s213 = smul.u32 2, %s19
        %s214 = ssub.s32 7, %s213
        %p215 = scmp.lt.s32.totalorder %s214, 2
        %s216 = scalar_select %p215, %s214, 2
        %s217 = smul.u32 128, %s216
        %v218 = vld [vmem:[%s168] sm:$0xff]
        %v219 = vld [vmem:[%s168 + $0x8] sm:$0xff]
        %v220 = vld [vmem:[%s168 + $0x10] sm:$0xff]
        %v221 = vld [vmem:[%s168 + $0x18] sm:$0xff]
        %v222 = vld [vmem:[%s168 + $0x20] sm:$0xff]
        %v223 = vld [vmem:[%s168 + $0x28] sm:$0xff]
        %v224 = vld [vmem:[%s212] sm:$0xff]
        %v225 = vld [vmem:[%s212 + $0x8] sm:$0xff]
        %v226 = vmax.f32 %v218, %v220
        %v227 = vmax.f32 %v226, %v219
        %228 = vmax.xlane.f32.xlu0 %v227
        %v229 = vpop.xlane.xlu0 %228
        %v230 = vmax.f32 %v221, %v223
        %v231 = vmax.f32 %v230, %v222
        %232 = vmax.xlane.f32.xlu0 %v231
        %v233 = vpop.xlane.xlu0 %232
        %v234 = vlaneseq
        %v235 = vand.u32 %v234, 127
        %v236 = vadd.s32 %v235, 128
        %v237 = vadd.s32 %v235, 256
        %238 = vset.pattern.permute.xlu0 0
        %239 = vperm.xlu0 %238, %v224
        %v240 = vpop.permute.xlu0 %239
        %241 = vset.pattern.permute.xlu0 0
        %242 = vperm.xlu0 %241, %v225
        %v243 = vpop.permute.xlu0 %242
        %vm244 = vcmp.eq.s32.totalorder %v235, %v240
        %vm245 = vcmp.eq.s32.totalorder %v236, %v240
        %vm246 = vcmp.eq.s32.totalorder %v237, %v240
        %vm247 = vcmp.eq.s32.totalorder %v235, %v243
        %vm248 = vcmp.eq.s32.totalorder %v236, %v243
        %vm249 = vcmp.eq.s32.totalorder %v237, %v243
        %v250 = vsel %vm244, %v218, 0.0
        %v251 = vsel %vm245, %v219, 0.0
        %v252 = vsel %vm246, %v220, 0.0
        %v253 = vsel %vm247, %v221, 0.0
        %v254 = vsel %vm248, %v222, 0.0
        %v255 = vsel %vm249, %v223, 0.0
        %v256 = vadd.f32 %v250, %v251
        %v257 = vadd.f32 %v256, %v252
        %258 = vadd.xlane.f32.xlu0 %v257
        %v259 = vpop.xlane.xlu0 %258
        %v260 = vadd.f32 %v253, %v254
        %v261 = vadd.f32 %v260, %v255
        %262 = vadd.xlane.f32.xlu0 %v261
        %v263 = vpop.xlane.xlu0 %262
        %v264 = vsub.f32 %v218, %v229
        %v265 = vsub.f32 %v219, %v229
        %v266 = vsub.f32 %v220, %v229
        %v267 = vsub.f32 %v221, %v233
        %v268 = vsub.f32 %v222, %v233
        %v269 = vsub.f32 %v223, %v233
        %v270 = vmul.f32 %v264, 1.442695
        %v271 = vpow.pop %v270
        %v272 = vmul.f32 %v265, 1.442695
        %v273 = vpow.pop %v272
        %v274 = vmul.f32 %v266, 1.442695
        %v275 = vpow.pop %v274
        %v276 = vmul.f32 %v267, 1.442695
        %v277 = vpow.pop %v276
        %v278 = vmul.f32 %v268, 1.442695
        %v279 = vpow.pop %v278
        %v280 = vmul.f32 %v269, 1.442695
        %v281 = vpow.pop %v280
        %v282 = vadd.f32 %v271, %v273
        %v283 = vadd.f32 %v282, %v275
        %284 = vadd.xlane.f32.xlu0 %v283
        %v285 = vpop.xlane.xlu0 %284
        %v286 = vadd.f32 %v277, %v279
        %v287 = vadd.f32 %v286, %v281
        %288 = vadd.xlane.f32.xlu0 %v287
        %v289 = vpop.xlane.xlu0 %288
        %v290 = vlog2.pop %v285
        %v291 = vmul.f32 %v290, 0.6931472
        %v292 = vlog2.pop %v289
        %v293 = vmul.f32 %v292, 0.6931472
        %v294 = vadd.f32 %v291, %v229
        %v295 = vadd.f32 %v293, %v233
        %v296 = vsub.f32 %v294, %v259
        %v297 = vsub.f32 %v295, %v263
        %s298 = smul.u32 %s19, 16
        %v299 = vlaneseq
        %v300 = vshrl.u32 %v299, 7
        %v301 = vadd.s32 %v300, 8
        %v302 = vstv %s298
        %v303 = vadd.s32 %v302, %v300
        %v304 = vadd.s32 %v302, %v301
        %vm305 = vcmp.lt.s32.totalorder %v303, 50
        %vm306 = vcmp.lt.s32.totalorder %v304, 50
        %v307 = vsel %vm305, %v296, 0.0
        %v308 = vsel %vm306, %v297, 0.0
        %vm309 = vcmask 7168
        %v310 = vsel %vm309, %v307, 0.0
        %v311 = vsel %vm309, %v308, 0.0
        %v312 = vadd.f32 %v310, %v311
        %313 = vadd.xlane.f32.xlu0 %v312
        %v314 = vpop.xlane.xlu0 %313
        %v315 = vrot.slane %v314, 4
        %v316 = vadd.f32 %v314, %v315
        %v317 = vrot.slane %v316, 2
        %v318 = vadd.f32 %v316, %v317
        %v319 = vrot.slane %v318, 1
        %v320 = vadd.f32 %v318, %v319
        %s321 = vtos %v320
        %v322 = vstv %s321
        %323 = vst [vmem:[%s197] sm:$0xff] %v322
        %s324 = sand.u32 %s79, 1
        %s325 = scalar_lea.sflag [#allocation4], %s324
        %s326 = sand.u32 %s79, 1
        %s327 = smul.addr %s326, 8
        %s328 = scalar_lea.vmem [#allocation5], %s327
        // Predicated region
        $region33: #{tpu_custom_call.1} parent=27 // pred_check
          %p329 = pneg %p89
        $region34: #{tpu_custom_call.1} parent=27 // pred_check_branch
          %331 = sbr.rel (%p329) target = $region36
        $region35: #{tpu_custom_call.1} parent=27 // pred_region
          %s333 = ssub.s32 128, 128
          %334 = vsyncadd %s325, %s333
          %s335 = smul.addr %s19, 128
          %s336 = scalar_lea.hbm %s2, %s335
          %s338 = sshll.u32 %s328, 4
          %s339 = int_to_ptr.vmem [resolvable:$true] %s338
          %341 = dma.vmem_to_hbm [thread:$0]  %s339, 128, %s336, %s325
        $region36: #{tpu_custom_call.1} parent=27 // pred_fallthru
          _
      $region28: #{tpu_custom_call.1} parent=5 // pred_fallthru
        _
      %p342 = scmp.le.s32.totalorder 2, %s14
      // Predicated region
      $region37: #{tpu_custom_call.1} parent=5 // pred_check
        %p343 = pneg %p342
      $region38: #{tpu_custom_call.1} parent=5 // pred_check_branch
        %345 = sbr.rel (%p343) target = $region40
      $region39: #{tpu_custom_call.1} parent=5 // pred_region
        %s346 = ssub.s32 %s14, 2
        // Predicated region
        $region41: #{tpu_custom_call.1} parent=39 // pred_check
          %p347 = pneg %p95
        $region42: #{tpu_custom_call.1} parent=39 // pred_check_branch
          %349 = sbr.rel (%p347) target = $region44
        $region43: #{tpu_custom_call.1} parent=39 // pred_region
          %s350 = sand.u32 %s80, 1
          %s351 = scalar_lea.sflag [#allocation4], %s350
          %s352 = sand.u32 %s80, 1
          %s353 = smul.addr %s352, 8
          %s354 = scalar_lea.vmem [#allocation5], %s353
          %355 = dma.done %s351, 128
        $region44: #{tpu_custom_call.1} parent=39 // pred_fallthru
          _
      $region40: #{tpu_custom_call.1} parent=5 // pred_fallthru
        _
    $region6: #{tpu_custom_call.1} parent=1 // loop_footer
      %s18 = sadd.s32 1, %s14
    $region7: #{tpu_custom_call.1} parent=1 // loop_footer_branch
      %13 = sbr.rel target = $region3
    $region8: #{tpu_custom_call.1} parent=1 // loop_exit
      _
    %356 = vsyncpa [#allocation3], 1
    %s357 = scalar_lea.sflag [#allocation3], 1
    %358 = vsyncpa %s357, 1
    %359 = vsyncpa [#allocation4], 1
    %s360 = scalar_lea.sflag [#allocation4], 1
    %361 = vsyncpa %s360, 1

</llo_original>
